<compile_context>
chip_gen: v6e
topology: v6e:2x2x1
jax: 0.10.0
libtpu: 0.0.40
codegen_flags: <defaults>
</compile_context>

<pallas_src>
import functools

import jax
import jax.numpy as jnp
from jax.experimental import pallas as pl
from jax.experimental.pallas import tpu as pltpu

_LANE = 128
_FUSED_CHUNK = 1024      # lanes processed per inner step in the fused kernel
_POOL_MAX_LANES = 8192   # caps the static per-step unroll in the pooling kernel


def _generation_params():
    """Per-TPU-generation VMEM budgets.  Falls back to the most conservative
    (v7x-class, 64 MiB VMEM) numbers if the hardware query is unavailable."""
    vmem_cap = None
    try:
        info = pltpu.get_tpu_info()
        vmem_cap = int(getattr(info, "vmem_capacity_bytes", 0)) or None
    except Exception:
        vmem_cap = None
    if vmem_cap is not None and vmem_cap >= (100 << 20):
        # v5e / v6e: 128 MiB physical VMEM.
        return dict(vmem_limit=96 << 20, block_budget=48 << 20,
                    fused_limit=80 << 20, min_block=2 << 20)
    # v7x-class (64 MiB physical VMEM) or unknown backend.
    return dict(vmem_limit=48 << 20, block_budget=20 << 20,
                fused_limit=40 << 20, min_block=4 << 20)


def _pick_tile(s, row_bytes, *, streams, budget, min_block, max_lanes=None):
    """Pick a lane tile: >= min_block bytes per block (per stream) when the
    double-buffered budget allows, multiple of 128, or the full extent S."""
    lane_cost = 2 * streams * max(row_bytes, 1)          # double-buffered streams
    budget_lanes = max(budget // lane_cost, _LANE)
    want_lanes = -(-min_block // max(row_bytes, 1))      # lanes to hit min_block
    t = min(budget_lanes, max(want_lanes, _LANE))
    if max_lanes is not None:
        t = min(t, max_lanes)
    t = max((t // _LANE) * _LANE, _LANE)
    return s if t >= s else t


# ----------------------------------------------------------------------------
# Fused single-pass kernel (x fully VMEM-resident, grid-less pallas_call).
#   x_ref:(N,C,S)  w1_ref:(C,Ch)  w2_ref:(Ch,C)  o_ref:(N,C,S)
# ----------------------------------------------------------------------------
def _fused_kernel(x_ref, w1_ref, w2_ref, o_ref, *, s_total, chunk, n_chunks, rem):
    f32 = jnp.float32
    n, c = x_ref.shape[0], x_ref.shape[1]

    # ---- global average pool: chunked f32 accumulation (low vreg pressure) ----
    acc = jnp.zeros((n, c, _LANE), f32)
    if n_chunks > 0:
        sub = chunk // _LANE

        def acc_body(k, a):
            for t in range(sub):                                   # static unroll
                start = pl.multiple_of(k * chunk + t * _LANE, _LANE)
                a = a + x_ref[:, :, pl.ds(start, _LANE)].astype(f32)
            return a

        acc = jax.lax.fori_loop(0, n_chunks, acc_body, acc)
    pooled = jnp.sum(acc, axis=-1)                                  # (N, C)
    if rem > 0:
        pooled = pooled + jnp.sum(
            x_ref[:, :, n_chunks * chunk:].astype(f32), axis=-1)
    pooled = pooled * (1.0 / s_total)

    # ---- fc -> relu -> fc -> sigmoid (bias-free) ----
    h = jnp.maximum(jnp.dot(pooled, w1_ref[...], preferred_element_type=f32), 0.0)
    sc = jax.nn.sigmoid(jnp.dot(h, w2_ref[...], preferred_element_type=f32))
    sc = sc[:, :, None].astype(o_ref.dtype)                         # (N, C, 1)

    # ---- rescale, chunked writes (never materialize the whole block) ----
    if n_chunks > 0:
        def out_body(k, carry):
            start = pl.multiple_of(k * chunk, _LANE)
            sl = pl.ds(start, chunk)
            o_ref[:, :, sl] = x_ref[:, :, sl] * sc
            return carry

        jax.lax.fori_loop(0, n_chunks, out_body, 0)
    if rem > 0:
        o_ref[:, :, n_chunks * chunk:] = x_ref[:, :, n_chunks * chunk:] * sc


# ----------------------------------------------------------------------------
# Tiled kernel 1: global average pool over S + two bias-free Linears + sigmoid.
#   x_ref:(N,C,tile)  w1_ref:(C,Ch)  w2_ref:(Ch,C)  scale_ref:(N,C,1)
#   acc_ref:(N,C,chunk_lanes) f32 VMEM scratch (persists across the S grid).
# ----------------------------------------------------------------------------
def _pool_fc_kernel(x_ref, w1_ref, w2_ref, scale_ref, acc_ref, *,
                    s_total, tile, chunk_lanes, n_chunks, mask_last):
    j = pl.program_id(0)
    last = pl.num_programs(0) - 1
    f32 = jnp.float32

    @pl.when(j == 0)
    def _init():
        acc_ref[...] = jnp.zeros_like(acc_ref)

    def accumulate(masked):
        acc = acc_ref[...]
        for k in range(n_chunks):                                   # static unroll
            chunk = x_ref[:, :, k * chunk_lanes:(k + 1) * chunk_lanes].astype(f32)
            if masked:  # static: only emitted for the final ragged block
                lane = jax.lax.broadcasted_iota(jnp.int32, chunk.shape, 2)
                keep = (j * tile + k * chunk_lanes + lane) < s_total
                chunk = jnp.where(keep, chunk, 0.0)
            acc = acc + chunk
        acc_ref[...] = acc

    if mask_last:
        pl.when(j == last)(lambda: accumulate(True))
        pl.when(j < last)(lambda: accumulate(False))
    else:
        accumulate(False)

    @pl.when(j == last)
    def _finalize():
        pooled = jnp.sum(acc_ref[...], axis=-1) * (1.0 / s_total)   # (N, C)
        h = jnp.dot(pooled, w1_ref[...], preferred_element_type=f32)
        h = jnp.maximum(h, 0.0)                                      # ReLU
        s = jnp.dot(h, w2_ref[...], preferred_element_type=f32)
        s = jax.nn.sigmoid(s)                                        # Sigmoid
        scale_ref[...] = s[:, :, None].astype(scale_ref.dtype)       # (N, C, 1)


# ----------------------------------------------------------------------------
# Tiled kernel 2: broadcast rescale x * scale, large lane-dense tiles over S.
#   x_ref:(N,C,tile)  s_ref:(N,C,1)  o_ref:(N,C,tile)
# ----------------------------------------------------------------------------
def _scale_kernel(x_ref, s_ref, o_ref):
    o_ref[...] = x_ref[...] * s_ref[...]


def caf_module_forward(x, w1_t, w2_t, *, path=None, pool_tile=None, scale_tile=None):
    """x: (N, C, T, H, W); w1_t: (C, C//r); w2_t: (C//r, C) (pre-transposed).
    path: None (auto), "fused", or "tiled" (for testing / overrides)."""
    N, C, T, H, W = x.shape
    S = T * H * W
    x_flat = x.reshape(N, C, S)
    itemsize = x.dtype.itemsize
    row_bytes = N * C * itemsize
    x_bytes = N * C * S * itemsize
    p = _generation_params()

    use_fused = (path == "fused") or (
        path is None and pool_tile is None and scale_tile is None
        and 2 * x_bytes + (4 << 20) <= p["fused_limit"])

    # ---------------- fused single-pass path (x VMEM-resident) ----------------
    if use_fused:
        n_chunks, rem = divmod(S, _FUSED_CHUNK)
        kernel = functools.partial(_fused_kernel, s_total=S, chunk=_FUSED_CHUNK,
                                   n_chunks=n_chunks, rem=rem)
        out_flat = pl.pallas_call(
            kernel,
            out_shape=jax.ShapeDtypeStruct((N, C, S), x.dtype),
            in_specs=[pl.BlockSpec(memory_space=pltpu.MemorySpace.VMEM)] * 3,
            out_specs=pl.BlockSpec(memory_space=pltpu.MemorySpace.VMEM),
            compiler_params=pltpu.CompilerParams(
                vmem_limit_bytes=p["vmem_limit"]),
        )(x_flat, w1_t, w2_t)
        return out_flat.reshape(N, C, T, H, W)

    # ---------------- tiled two-pass fallback ----------------
    # kernel 1: pooled scale (N, C, 1)
    acc_bytes = N * C * _LANE * 4
    if pool_tile is None:
        pool_tile = _pick_tile(
            S, row_bytes, streams=1,
            budget=max(p["block_budget"] - acc_bytes - (1 << 20), 1 << 20),
            min_block=p["min_block"], max_lanes=_POOL_MAX_LANES)
    assert pool_tile == S or pool_tile % _LANE == 0, "pool_tile must be S or k*128"

    if pool_tile % _LANE == 0:
        chunk_lanes, n_chunks = _LANE, pool_tile // _LANE
    else:  # full-extent small-S block
        chunk_lanes, n_chunks = pool_tile, 1
    # (N, C, chunk_lanes) f32 acc slab + double-buffered input block must fit.
    assert acc_bytes + 2 * row_bytes * pool_tile <= p["vmem_limit"], \
        "N*C too large for the pooling accumulator / block budget"

    pool_grid = pl.cdiv(S, pool_tile)
    mask_last = (S % pool_tile) != 0

    kernel1 = functools.partial(
        _pool_fc_kernel, s_total=S, tile=pool_tile,
        chunk_lanes=chunk_lanes, n_chunks=n_chunks, mask_last=mask_last)

    scale = pl.pallas_call(
        kernel1,
        out_shape=jax.ShapeDtypeStruct((N, C, 1), x.dtype),
        grid=(pool_grid,),
        in_specs=[
            pl.BlockSpec((N, C, pool_tile), lambda j: (0, 0, j)),
            pl.BlockSpec(w1_t.shape, lambda j: (0, 0)),
            pl.BlockSpec(w2_t.shape, lambda j: (0, 0)),
        ],
        out_specs=pl.BlockSpec((N, C, 1), lambda j: (0, 0, 0)),
        scratch_shapes=[pltpu.VMEM((N, C, chunk_lanes), jnp.float32)],
        compiler_params=pltpu.CompilerParams(
            dimension_semantics=("arbitrary",),        # carried accumulator
            vmem_limit_bytes=p["vmem_limit"]),
    )(x_flat, w1_t, w2_t)

    # kernel 2: elementwise rescale
    if scale_tile is None:
        scale_tile = _pick_tile(S, row_bytes, streams=2,
                                budget=p["block_budget"],
                                min_block=p["min_block"])
    assert scale_tile == S or scale_tile % _LANE == 0, "scale_tile must be S or k*128"
    scale_grid = pl.cdiv(S, scale_tile)

    out_flat = pl.pallas_call(
        _scale_kernel,
        out_shape=jax.ShapeDtypeStruct((N, C, S), x.dtype),
        grid=(scale_grid,),
        in_specs=[
            pl.BlockSpec((N, C, scale_tile), lambda j: (0, 0, j)),
            pl.BlockSpec((N, C, 1), lambda j: (0, 0, 0)),
        ],
        out_specs=pl.BlockSpec((N, C, scale_tile), lambda j: (0, 0, j)),
        compiler_params=pltpu.CompilerParams(
            dimension_semantics=("parallel",),         # disjoint output tiles
            vmem_limit_bytes=p["vmem_limit"]),
    )(x_flat, scale)

    return out_flat.reshape(N, C, T, H, W)


def caf_module_ref(x, w1_t, w2_t):
    """Pure-JAX reference matching the PyTorch forward."""
    y = jnp.mean(x, axis=(2, 3, 4))                   # AdaptiveAvgPool3d(1)
    y = jnp.maximum(y @ w1_t, 0.0)                    # Linear + ReLU (no bias)
    y = jax.nn.sigmoid(y @ w2_t)                      # Linear + Sigmoid (no bias)
    return x * y[:, :, None, None, None]


if __name__ == "__main__":
    # CAFModule(channels=32, reduction=16) -> hidden = 2.
    N, C, reduction = 2, 32, 16
    Ch = C // reduction

    key = jax.random.PRNGKey(0)
    kx1, kx2, k1, k2 = jax.random.split(key, 4)

    # PyTorch Linear weights are (out, in); store pre-transposed for y @ W^T.
    w1 = jax.random.normal(k1, (Ch, C), dtype=jnp.float32) * 0.1   # Linear(C -> C//r)
    w2 = jax.random.normal(k2, (C, Ch), dtype=jnp.float32) * 0.1   # Linear(C//r -> C)
    w1_t, w2_t = w1.T, w2.T                                         # (C, Ch), (Ch, C)

    # Case 1: small input -> auto-dispatch takes the fused single-pass path.
    x1 = jax.random.normal(kx1, (N, C, 4, 8, 8), dtype=jnp.float32)   # S = 256
    ref1 = caf_module_ref(x1, w1_t, w2_t)
    out1 = jax.block_until_ready(caf_module_forward(x1, w1_t, w2_t))
    assert out1.shape == x1.shape
    assert jnp.allclose(out1, ref1, atol=1e-5, rtol=1e-5), "fused path mismatch"

    # Case 2: force the tiled two-pass path (multi-step grid + accumulator).
    out2 = jax.block_until_ready(
        caf_module_forward(x1, w1_t, w2_t, path="tiled",
                           pool_tile=128, scale_tile=128))
    assert jnp.allclose(out2, ref1, atol=1e-5, rtol=1e-5), "tiled path mismatch"

    # Case 3: ragged S (not a multiple of the tile) -> masked final pool block
    # and clipped rescale writeback.
    x2 = jax.random.normal(kx2, (N, C, 3, 10, 10), dtype=jnp.float32)  # S = 300
    ref3 = caf_module_ref(x2, w1_t, w2_t)
    out3 = jax.block_until_ready(
        caf_module_forward(x2, w1_t, w2_t, path="tiled",
                           pool_tile=128, scale_tile=128))
    assert jnp.allclose(out3, ref3, atol=1e-5, rtol=1e-5), "ragged tiled path mismatch"

    # Case 4: ragged S through the fused path (tail-lane handling).
    out4 = jax.block_until_ready(caf_module_forward(x2, w1_t, w2_t))
    assert jnp.allclose(out4, ref3, atol=1e-5, rtol=1e-5), "fused ragged path mismatch"

    print("KERNEL_OK")
</pallas_src>

<mosaic_0001>
module attributes {stable_mosaic.version = 11 : i64} {
  func.func @_fused_kernel(%arg0: memref<2x32x256xf32, #tpu.memory_space<vmem>>, %arg1: memref<32x2xf32, #tpu.memory_space<vmem>>, %arg2: memref<2x32xf32, #tpu.memory_space<vmem>>, %arg3: memref<2x32x256xf32, #tpu.memory_space<vmem>>) attributes {dimension_semantics = [], scalar_prefetch = 0 : i64, scratch_operands = 0 : i64, tpu.core_type = #tpu.core_type<tc>} {
    %cst = arith.constant 0.000000e+00 : f32
    %0 = vector.broadcast %cst : f32 to vector<2x32x128xf32>
    %cst_0 = arith.constant dense<0.000000e+00> : vector<2x32xf32>
    %1 = vector.multi_reduction <add>, %0, %cst_0 [2] : vector<2x32x128xf32> to vector<2x32xf32>
    %c0 = arith.constant 0 : index
    %c0_1 = arith.constant 0 : index
    %c0_2 = arith.constant 0 : index
    %2 = vector.load %arg0[%c0, %c0_1, %c0_2] : memref<2x32x256xf32, #tpu.memory_space<vmem>>, vector<2x32x256xf32>
    %cst_3 = arith.constant dense<0.000000e+00> : vector<2x32xf32>
    %3 = vector.multi_reduction <add>, %2, %cst_3 [2] : vector<2x32x256xf32> to vector<2x32xf32>
    %4 = arith.addf %1, %3 : vector<2x32xf32>
    %cst_4 = arith.constant 3.906250e-03 : f32
    %5 = vector.broadcast %cst_4 : f32 to vector<2x32xf32>
    %6 = arith.mulf %4, %5 : vector<2x32xf32>
    %c0_5 = arith.constant 0 : index
    %c0_6 = arith.constant 0 : index
    %7 = vector.load %arg1[%c0_5, %c0_6] : memref<32x2xf32, #tpu.memory_space<vmem>>, vector<32x2xf32>
    %cst_7 = arith.constant dense<0.000000e+00> : vector<2x2xf32>
    %8 = tpu.matmul %6, %7, %cst_7 {dimension_numbers = #tpu.dot_dimension_numbers<[1], [0], [0], [1], [0, 0, 1, 1], [], []>} : vector<2x32xf32>, vector<32x2xf32>, vector<2x2xf32> -> vector<2x2xf32>
    %cst_8 = arith.constant 0.000000e+00 : f32
    %9 = vector.broadcast %cst_8 : f32 to vector<2x2xf32>
    %10 = arith.maximumf %8, %9 : vector<2x2xf32>
    %c0_9 = arith.constant 0 : index
    %c0_10 = arith.constant 0 : index
    %11 = vector.load %arg2[%c0_9, %c0_10] : memref<2x32xf32, #tpu.memory_space<vmem>>, vector<2x32xf32>
    %cst_11 = arith.constant dense<0.000000e+00> : vector<2x32xf32>
    %12 = tpu.matmul %10, %11, %cst_11 {dimension_numbers = #tpu.dot_dimension_numbers<[1], [0], [0], [1], [0, 0, 1, 1], [], []>} : vector<2x2xf32>, vector<2x32xf32>, vector<2x32xf32> -> vector<2x32xf32>
    %13 = arith.negf %12 : vector<2x32xf32>
    %14 = math.exp %13 : vector<2x32xf32>
    %cst_12 = arith.constant 1.000000e+00 : f32
    %15 = vector.broadcast %cst_12 : f32 to vector<2x32xf32>
    %16 = arith.addf %15, %14 : vector<2x32xf32>
    %17 = arith.divf %15, %16 : vector<2x32xf32>
    %18 = vector.shape_cast %17 : vector<2x32xf32> to vector<2x32x1xf32>
    %c0_13 = arith.constant 0 : index
    %c0_14 = arith.constant 0 : index
    %c0_15 = arith.constant 0 : index
    %19 = vector.load %arg0[%c0_13, %c0_14, %c0_15] : memref<2x32x256xf32, #tpu.memory_space<vmem>>, vector<2x32x256xf32>
    %20 = vector.broadcast %18 : vector<2x32x1xf32> to vector<2x32x256xf32>
    %21 = arith.mulf %19, %20 : vector<2x32x256xf32>
    %c0_16 = arith.constant 0 : index
    %c0_17 = arith.constant 0 : index
    %c0_18 = arith.constant 0 : index
    %22 = vector.load %arg3[%c0_16, %c0_17, %c0_18] : memref<2x32x256xf32, #tpu.memory_space<vmem>>, vector<2x32x256xf32>
    tpu.vector_store %arg3[%c0_16, %c0_17, %c0_18], %21 {strides = array<i32>} : memref<2x32x256xf32, #tpu.memory_space<vmem>>, vector<2x32x256xf32>,
    return
  }
}

</mosaic_0001>

<llo_original>
// kernel: tpu_custom_call.1
$region0: #{tpu_custom_call.1}
  #allocation0 [shape = 'u32[]', space=smem, size = 0x4, offset = 0x4, fixed_abs, tag = 'smem constant byte address 0x4 - core index']
  #allocation1 [shape = 'u32[144,128]{1,0:T(1,128)}', space=vmem, size = 0x12000, scoped, tag = 'internal scratch']
  %s0 = inlined_call_operand.hbm [shape: f32[2,32,256], index: 0, kind: input, shape index: {}]
  %s1 = inlined_call_operand.vmem [shape: f32[32,2], index: 1, kind: input, shape index: {}]
  %s2 = inlined_call_operand.vmem [shape: f32[2,32], index: 2, kind: input, shape index: {}]
  %s3 = inlined_call_operand.hbm [shape: f32[2,32,256], index: 3, kind: output, shape index: {}]
  %s4 = sld [smem:[#allocation0]]
  $region26: #{tpu_custom_call.1} parent=0
    _
  %s6 = ssub.s32 1, %s4
  %s7 = scalar_select 0, %s6, %s4
  $region1: #{tpu_custom_call.1} parent=0
    #allocation2 [shape = 'u8[65536]{0}', space=vmem, size = 0x10000, scoped, tag = 'input window, operand 0, single buffered']
    #allocation3 [shape = 's32[1]{0}', space=sflag, size = 0x4, scoped, tag = 'scoped memory for tpu_custom_call.1']
    #allocation4 [shape = 's32[1]{0}', space=sflag, size = 0x4, scoped, tag = 'scoped memory for tpu_custom_call.1']
    #allocation5 [shape = 'u8[65536]{0}', space=vmem, size = 0x10000, scoped, tag = 'output window, operand 0, single buffered']
    %8 = vsyncpa [#allocation3], 0
    %9 = vsyncpa [#allocation4], 0
    // Predicated region
    $region2: #{tpu_custom_call.1} parent=1 // pred_check
      _
    $region3: #{tpu_custom_call.1} parent=1 // pred_check_branch
      %11 = sbr.rel (0) target = $region5
    $region4: #{tpu_custom_call.1} parent=1 // pred_region
      %s13 = ssub.s32 2048, 2048
      %14 = vsyncadd [#allocation3], %s13
      %s15 = sshll.u32 [#allocation2], 4
      %s16 = int_to_ptr.vmem [resolvable:$true] %s15
      %21 = dma.hbm_to_vmem [thread:$0]  %s0, 2048, %s16, [#allocation3], 256, 256, 16
    $region5: #{tpu_custom_call.1} parent=1 // pred_fallthru
      _
    // Predicated region
    $region6: #{tpu_custom_call.1} parent=1 // pred_check
      _
    $region7: #{tpu_custom_call.1} parent=1 // pred_check_branch
      %23 = sbr.rel (0) target = $region9
    $region8: #{tpu_custom_call.1} parent=1 // pred_region
      _
    $region9: #{tpu_custom_call.1} parent=1 // pred_fallthru
      _
    // Predicated region
    $region10: #{tpu_custom_call.1} parent=1 // pred_check
      _
    $region11: #{tpu_custom_call.1} parent=1 // pred_check_branch
      %25 = sbr.rel (0) target = $region13
    $region12: #{tpu_custom_call.1} parent=1 // pred_region
      _
    $region13: #{tpu_custom_call.1} parent=1 // pred_fallthru
      _
    // Predicated region
    $region14: #{tpu_custom_call.1} parent=1 // pred_check
      _
    $region15: #{tpu_custom_call.1} parent=1 // pred_check_branch
      %27 = sbr.rel (0) target = $region17
    $region16: #{tpu_custom_call.1} parent=1 // pred_region
      %28 = dma.done [#allocation3], 2048
    $region17: #{tpu_custom_call.1} parent=1 // pred_fallthru
      _
    %29 = vadd.xlane.f32.xlu0 0.0
    %v30 = vpop.xlane.xlu0 %29
    %v31 = vld [vmem:[#allocation2] sm:$0xff]
    %v32 = vld [vmem:[#allocation2 + $0x8] sm:$0xff]
    %v33 = vld [vmem:[#allocation2 + $0x10] sm:$0xff]
    %v34 = vld [vmem:[#allocation2 + $0x18] sm:$0xff]
    %v35 = vld [vmem:[#allocation2 + $0x20] sm:$0xff]
    %v36 = vld [vmem:[#allocation2 + $0x28] sm:$0xff]
    %v37 = vld [vmem:[#allocation2 + $0x30] sm:$0xff]
    %v38 = vld [vmem:[#allocation2 + $0x38] sm:$0xff]
    %v39 = vld [vmem:[#allocation2 + $0x40] sm:$0xff]
    %v40 = vld [vmem:[#allocation2 + $0x48] sm:$0xff]
    %v41 = vld [vmem:[#allocation2 + $0x50] sm:$0xff]
    %v42 = vld [vmem:[#allocation2 + $0x58] sm:$0xff]
    %v43 = vld [vmem:[#allocation2 + $0x60] sm:$0xff]
    %v44 = vld [vmem:[#allocation2 + $0x68] sm:$0xff]
    %v45 = vld [vmem:[#allocation2 + $0x70] sm:$0xff]
    %v46 = vld [vmem:[#allocation2 + $0x78] sm:$0xff]
    %v47 = vadd.f32 %v31, %v32
    %48 = vadd.xlane.f32.xlu0 %v47
    %v49 = vpop.xlane.xlu0 %48
    %v50 = vadd.f32 %v33, %v34
    %51 = vadd.xlane.f32.xlu0 %v50
    %v52 = vpop.xlane.xlu0 %51
    %v53 = vadd.f32 %v35, %v36
    %54 = vadd.xlane.f32.xlu0 %v53
    %v55 = vpop.xlane.xlu0 %54
    %v56 = vadd.f32 %v37, %v38
    %57 = vadd.xlane.f32.xlu0 %v56
    %v58 = vpop.xlane.xlu0 %57
    %v59 = vadd.f32 %v39, %v40
    %60 = vadd.xlane.f32.xlu0 %v59
    %v61 = vpop.xlane.xlu0 %60
    %v62 = vadd.f32 %v41, %v42
    %63 = vadd.xlane.f32.xlu0 %v62
    %v64 = vpop.xlane.xlu0 %63
    %v65 = vadd.f32 %v43, %v44
    %66 = vadd.xlane.f32.xlu0 %v65
    %v67 = vpop.xlane.xlu0 %66
    %v68 = vadd.f32 %v45, %v46
    %69 = vadd.xlane.f32.xlu0 %v68
    %v70 = vpop.xlane.xlu0 %69
    %v71 = vadd.f32 %v30, %v49
    %v72 = vadd.f32 %v30, %v52
    %v73 = vadd.f32 %v30, %v55
    %v74 = vadd.f32 %v30, %v58
    %v75 = vadd.f32 %v30, %v61
    %v76 = vadd.f32 %v30, %v64
    %v77 = vadd.f32 %v30, %v67
    %v78 = vadd.f32 %v30, %v70
    %v79 = vmul.f32 %v71, 0.00390625
    %v80 = vmul.f32 %v72, 0.00390625
    %v81 = vmul.f32 %v73, 0.00390625
    %v82 = vmul.f32 %v74, 0.00390625
    %v83 = vmul.f32 %v75, 0.00390625
    %v84 = vmul.f32 %v76, 0.00390625
    %v85 = vmul.f32 %v77, 0.00390625
    %v86 = vmul.f32 %v78, 0.00390625
    %v87 = vld [vmem:[%s1] sm:$0xff]
    %v88 = vld [vmem:[%s1 + $0x8] sm:$0xff]
    %v89 = vld [vmem:[%s1 + $0x10] sm:$0xff]
    %v90 = vld [vmem:[%s1 + $0x18] sm:$0xff]
    %v99 = vlaneseq
    %v100 = vand.u32 %v99, 127
    %v101 = vlaneseq
    %v102 = vshrl.u32 %v101, 7
    %v103 = vsub.s32 %v100, %v102
    %v104 = vrot.slane %v79, %v103
    %v105 = vadd.s32 %v100, 4294967288
    %v106 = vlaneseq
    %v107 = vshrl.u32 %v106, 7
    %v108 = vsub.s32 %v105, %v107
    %v109 = vrot.slane %v80, %v108
    %vm110 = vcmask 130112
    %v111 = vsel %vm110, %v109, %v104
    %v112 = vadd.s32 %v100, 4294967280
    %v113 = vlaneseq
    %v114 = vshrl.u32 %v113, 7
    %v115 = vsub.s32 %v112, %v114
    %v116 = vrot.slane %v81, %v115
    %vm117 = vcmask 195712
    %v118 = vsel %vm117, %v116, %v111
    %v119 = vadd.s32 %v100, 4294967272
    %v120 = vlaneseq
    %v121 = vshrl.u32 %v120, 7
    %v122 = vsub.s32 %v119, %v121
    %v123 = vrot.slane %v82, %v122
    %vm124 = vcmask 261312
    %v125 = vsel %vm124, %v123, %v118
    %v126 = vlaneseq
    %v127 = vshrl.u32 %v126, 7
    %v128 = vsub.s32 %v100, %v127
    %v129 = vrot.slane %v83, %v128
    %v130 = vlaneseq
    %v131 = vshrl.u32 %v130, 7
    %v132 = vsub.s32 %v105, %v131
    %v133 = vrot.slane %v84, %v132
    %v134 = vsel %vm110, %v133, %v129
    %v135 = vlaneseq
    %v136 = vshrl.u32 %v135, 7
    %v137 = vsub.s32 %v112, %v136
    %v138 = vrot.slane %v85, %v137
    %v139 = vsel %vm117, %v138, %v134
    %v140 = vlaneseq
    %v141 = vshrl.u32 %v140, 7
    %v142 = vsub.s32 %v119, %v141
    %v143 = vrot.slane %v86, %v142
    %v144 = vsel %vm124, %v143, %v139
    %vm145 = vcmask 1041409
    %v146 = vsel %vm145, %v144, %v125
    %vm147 = vcmask 261120
    %v148 = vsel %vm147, %v146, 0
    %150 = vmatprep.subr.mxu0 0.0
    %151 = vmatpush1.msra.mxu0 0.0
    %152 = vmatprep.subr.mxu0 0.0
    %153 = vmatpush1.msra.mxu0 0.0
    %154 = vmatprep.subr.mxu0 0.0
    %155 = vmatpush1.msra.mxu0 0.0
    %156 = vmatprep.subr.mxu0 0.0
    %157 = vmatpush1.msra.mxu0 0.0
    %158 = vmatprep.subr.mxu0 0.0
    %159 = vmatpush1.msra.mxu0 0.0
    %160 = vmatprep.subr.mxu0 0.0
    %161 = vmatpush1.msra.mxu0 0.0
    %162 = vmatprep.subr.mxu0 0.0
    %163 = vmatpush1.msra.mxu0 0.0
    %164 = vmatprep.subr.mxu0 0.0
    %165 = vmatpush1.msra.mxu0 0.0
    %166 = vmatprep.subr.mxu0 0.0
    %167 = vmatpush1.msra.mxu0 0.0
    %168 = vmatprep.subr.mxu0 0.0
    %169 = vmatpush1.msra.mxu0 0.0
    %170 = vmatprep.subr.mxu0 0.0
    %171 = vmatpush1.msra.mxu0 0.0
    %172 = vmatprep.subr.mxu0 0.0
    %173 = vmatpush1.msra.mxu0 0.0
    %174 = vmatprep.subr.mxu0 0.0
    %175 = vmatpush1.msra.mxu0 %v90
    %176 = vmatprep.subr.mxu0 0.0
    %177 = vmatpush1.msra.mxu0 %v89
    %178 = vmatprep.subr.mxu0 0.0
    %179 = vmatpush1.msra.mxu0 %v88
    %180 = vmatprep.subr.mxu0 0.0
    %181 = vmatpush1.msra.mxu0 %v87
    %182 = vmatprep.subr.mxu0 0.0
    %183 = vmatpush2.msra.mxu0 0.0
    %184 = vmatprep.subr.mxu0 0.0
    %185 = vmatpush2.msra.mxu0 0.0
    %186 = vmatprep.subr.mxu0 0.0
    %187 = vmatpush2.msra.mxu0 0.0
    %188 = vmatprep.subr.mxu0 0.0
    %189 = vmatpush2.msra.mxu0 0.0
    %190 = vmatprep.subr.mxu0 0.0
    %191 = vmatpush2.msra.mxu0 0.0
    %192 = vmatprep.subr.mxu0 0.0
    %193 = vmatpush2.msra.mxu0 0.0
    %194 = vmatprep.subr.mxu0 0.0
    %195 = vmatpush2.msra.mxu0 0.0
    %196 = vmatprep.subr.mxu0 0.0
    %197 = vmatpush2.msra.mxu0 0.0
    %198 = vmatprep.subr.mxu0 0.0
    %199 = vmatpush2.msra.mxu0 0.0
    %200 = vmatprep.subr.mxu0 0.0
    %201 = vmatpush2.msra.mxu0 0.0
    %202 = vmatprep.subr.mxu0 0.0
    %203 = vmatpush2.msra.mxu0 0.0
    %204 = vmatprep.subr.mxu0 0.0
    %205 = vmatpush2.msra.mxu0 0.0
    %206 = vmatprep.subr.mxu0 0.0
    %207 = vmatpush2.msra.mxu0 0.0
    %208 = vmatprep.subr.mxu0 0.0
    %209 = vmatpush2.msra.mxu0 0.0
    %210 = vmatprep.subr.mxu0 0.0
    %211 = vmatpush2.msra.mxu0 0.0
    %212 = vmatprep.subr.mxu0 0.0
    %213 = vmatpush2.msra.mxu0 0.0
    %214 = vmatprep.mubr.f32.mxu0 0.0
    %215 = vmatmul.mubr.f32.gmra.mxu0 %v148
    %v216 = vpop.f32.mrf.mxu0
    %v217 = vadd.f32 0.0, %v216
    %v218 = vpop.f32.mrf.mxu0
    %219 = vdwg.mxu0
    %v220 = vmax.f32 %v217, 0.0
    %v221 = vld [vmem:[%s2] sm:$0x3]
    %vm222 = vcmask 15360
    %v224 = vsel %vm222, %v220, 0
    %vm226 = vcmask 1041408
    %v228 = vsel %vm226, %v221, 0
    %230 = vmatprep.subr.mxu0 0.0
    %231 = vmatpush1.msra.mxu0 0.0
    %232 = vmatprep.subr.mxu0 0.0
    %233 = vmatpush1.msra.mxu0 0.0
    %234 = vmatprep.subr.mxu0 0.0
    %235 = vmatpush1.msra.mxu0 0.0
    %236 = vmatprep.subr.mxu0 0.0
    %237 = vmatpush1.msra.mxu0 0.0
    %238 = vmatprep.subr.mxu0 0.0
    %239 = vmatpush1.msra.mxu0 0.0
    %240 = vmatprep.subr.mxu0 0.0
    %241 = vmatpush1.msra.mxu0 0.0
    %242 = vmatprep.subr.mxu0 0.0
    %243 = vmatpush1.msra.mxu0 0.0
    %244 = vmatprep.subr.mxu0 0.0
    %245 = vmatpush1.msra.mxu0 0.0
    %246 = vmatprep.subr.mxu0 0.0
    %247 = vmatpush1.msra.mxu0 0.0
    %248 = vmatprep.subr.mxu0 0.0
    %249 = vmatpush1.msra.mxu0 0.0
    %250 = vmatprep.subr.mxu0 0.0
    %251 = vmatpush1.msra.mxu0 0.0
    %252 = vmatprep.subr.mxu0 0.0
    %253 = vmatpush1.msra.mxu0 0.0
    %254 = vmatprep.subr.mxu0 0.0
    %255 = vmatpush1.msra.mxu0 0.0
    %256 = vmatprep.subr.mxu0 0.0
    %257 = vmatpush1.msra.mxu0 0.0
    %258 = vmatprep.subr.mxu0 0.0
    %259 = vmatpush1.msra.mxu0 0.0
    %260 = vmatprep.subr.mxu0 0.0
    %261 = vmatpush1.msra.mxu0 %v228
    %262 = vmatprep.subr.mxu0 0.0
    %263 = vmatpush2.msra.mxu0 0.0
    %264 = vmatprep.subr.mxu0 0.0
    %265 = vmatpush2.msra.mxu0 0.0
    %266 = vmatprep.subr.mxu0 0.0
    %267 = vmatpush2.msra.mxu0 0.0
    %268 = vmatprep.subr.mxu0 0.0
    %269 = vmatpush2.msra.mxu0 0.0
    %270 = vmatprep.subr.mxu0 0.0
    %271 = vmatpush2.msra.mxu0 0.0
    %272 = vmatprep.subr.mxu0 0.0
    %273 = vmatpush2.msra.mxu0 0.0
    %274 = vmatprep.subr.mxu0 0.0
    %275 = vmatpush2.msra.mxu0 0.0
    %276 = vmatprep.subr.mxu0 0.0
    %277 = vmatpush2.msra.mxu0 0.0
    %278 = vmatprep.subr.mxu0 0.0
    %279 = vmatpush2.msra.mxu0 0.0
    %280 = vmatprep.subr.mxu0 0.0
    %281 = vmatpush2.msra.mxu0 0.0
    %282 = vmatprep.subr.mxu0 0.0
    %283 = vmatpush2.msra.mxu0 0.0
    %284 = vmatprep.subr.mxu0 0.0
    %285 = vmatpush2.msra.mxu0 0.0
    %286 = vmatprep.subr.mxu0 0.0
    %287 = vmatpush2.msra.mxu0 0.0
    %288 = vmatprep.subr.mxu0 0.0
    %289 = vmatpush2.msra.mxu0 0.0
    %290 = vmatprep.subr.mxu0 0.0
    %291 = vmatpush2.msra.mxu0 0.0
    %292 = vmatprep.subr.mxu0 0.0
    %293 = vmatpush2.msra.mxu0 0.0
    %294 = vmatprep.mubr.f32.mxu0 0.0
    %295 = vmatmul.mubr.f32.gmra.mxu0 %v224
    %v296 = vpop.f32.mrf.mxu0
    %v297 = vadd.f32 0.0, %v296
    %v298 = vpop.f32.mrf.mxu0
    %299 = vdwg.mxu0
    %v300 = vxor.u32 %v297, 2147483648
    %v301 = vmul.f32 %v300, 1.442695
    %v302 = vpow.pop %v301
    %v303 = vadd.f32 %v302, 1.0
    %v304 = vrcp.pop %v303
    %v305 = vmul.f32 1.0, %v304
    %v306 = vlaneseq
    %v307 = vshrl.u32 %v306, 7
    %v308 = vsub.s32 0, %v307
    %v309 = vrot.slane %v305, %v308
    %311 = vbcast.lane.b32.xlu0 %v309, 256
    %v312 = vpop.permute.xlu0 %311
    %s314 = sor.u32 256, 8
    %315 = vbcast.lane.b32.xlu0 %v309, %s314
    %v316 = vpop.permute.xlu0 %315
    %s318 = sor.u32 256, 16
    %319 = vbcast.lane.b32.xlu0 %v309, %s318
    %v320 = vpop.permute.xlu0 %319
    %s322 = sor.u32 256, 24
    %323 = vbcast.lane.b32.xlu0 %v309, %s322
    %v324 = vpop.permute.xlu0 %323
    %v325 = vlaneseq
    %v326 = vshrl.u32 %v325, 7
    %v327 = vsub.s32 1, %v326
    %v328 = vrot.slane %v305, %v327
    %330 = vbcast.lane.b32.xlu0 %v328, 256
    %v331 = vpop.permute.xlu0 %330
    %s333 = sor.u32 256, 8
    %334 = vbcast.lane.b32.xlu0 %v328, %s333
    %v335 = vpop.permute.xlu0 %334
    %s337 = sor.u32 256, 16
    %338 = vbcast.lane.b32.xlu0 %v328, %s337
    %v339 = vpop.permute.xlu0 %338
    %s341 = sor.u32 256, 24
    %342 = vbcast.lane.b32.xlu0 %v328, %s341
    %v343 = vpop.permute.xlu0 %342
    %v344 = vmul.f32 %v31, %v312
    %v345 = vmul.f32 %v32, %v312
    %v346 = vmul.f32 %v33, %v316
    %v347 = vmul.f32 %v34, %v316
    %v348 = vmul.f32 %v35, %v320
    %v349 = vmul.f32 %v36, %v320
    %v350 = vmul.f32 %v37, %v324
    %v351 = vmul.f32 %v38, %v324
    %v352 = vmul.f32 %v39, %v331
    %v353 = vmul.f32 %v40, %v331
    %v354 = vmul.f32 %v41, %v335
    %v355 = vmul.f32 %v42, %v335
    %v356 = vmul.f32 %v43, %v339
    %v357 = vmul.f32 %v44, %v339
    %v358 = vmul.f32 %v45, %v343
    %v359 = vmul.f32 %v46, %v343
    %360 = vst [vmem:[#allocation5] sm:$0xff] %v344
    %361 = vst [vmem:[#allocation5 + $0x8] sm:$0xff] %v345
    %362 = vst [vmem:[#allocation5 + $0x10] sm:$0xff] %v346
    %363 = vst [vmem:[#allocation5 + $0x18] sm:$0xff] %v347
    %364 = vst [vmem:[#allocation5 + $0x20] sm:$0xff] %v348
    %365 = vst [vmem:[#allocation5 + $0x28] sm:$0xff] %v349
    %366 = vst [vmem:[#allocation5 + $0x30] sm:$0xff] %v350
    %367 = vst [vmem:[#allocation5 + $0x38] sm:$0xff] %v351
    %368 = vst [vmem:[#allocation5 + $0x40] sm:$0xff] %v352
    %369 = vst [vmem:[#allocation5 + $0x48] sm:$0xff] %v353
    %370 = vst [vmem:[#allocation5 + $0x50] sm:$0xff] %v354
    %371 = vst [vmem:[#allocation5 + $0x58] sm:$0xff] %v355
    %372 = vst [vmem:[#allocation5 + $0x60] sm:$0xff] %v356
    %373 = vst [vmem:[#allocation5 + $0x68] sm:$0xff] %v357
    %374 = vst [vmem:[#allocation5 + $0x70] sm:$0xff] %v358
    %375 = vst [vmem:[#allocation5 + $0x78] sm:$0xff] %v359
    // Predicated region
    $region18: #{tpu_custom_call.1} parent=1 // pred_check
      _
    $region19: #{tpu_custom_call.1} parent=1 // pred_check_branch
      %377 = sbr.rel (0) target = $region21
    $region20: #{tpu_custom_call.1} parent=1 // pred_region
      %s379 = ssub.s32 2048, 2048
      %380 = vsyncadd [#allocation4], %s379
      %s381 = sshll.u32 [#allocation5], 4
      %s382 = int_to_ptr.vmem [resolvable:$true] %s381
      %387 = dma.vmem_to_hbm [thread:$0]  %s382, 2048, %s3, [#allocation4], 256, 256, 16
    $region21: #{tpu_custom_call.1} parent=1 // pred_fallthru
      _
    // Predicated region
    $region22: #{tpu_custom_call.1} parent=1 // pred_check
      _
    $region23: #{tpu_custom_call.1} parent=1 // pred_check_branch
      %389 = sbr.rel (0) target = $region25
    $region24: #{tpu_custom_call.1} parent=1 // pred_region
      %390 = dma.done [#allocation4], 2048
    $region25: #{tpu_custom_call.1} parent=1 // pred_fallthru
      _
    %391 = vsyncpa [#allocation3], 1
    %392 = vsyncpa [#allocation4], 1

</llo_original>
